<compile_context>
chip_gen: v7x
topology: tpu7x:2x2x1
jax: 0.10.0
libtpu: 0.0.40
codegen_flags: <defaults>
</compile_context>

<pallas_src>
import functools

import jax
import jax.numpy as jnp
from jax.experimental import pallas as pl
from jax.experimental.pallas import tpu as pltpu


def _round_up(x, m):
    return ((x + m - 1) // m) * m


def _adain_kernel(c_ref, s_ref, o_ref, *, eps):
    # c_ref: (rb, HWc)  content rows (one row = one (n, c) instance)
    # s_ref: (rb, HWs)  style rows
    # o_ref: (rb, HWc)  output rows
    c = c_ref[...].astype(jnp.float32)
    s = s_ref[...].astype(jnp.float32)

    hw_c = c.shape[-1]
    hw_s = s.shape[-1]

    # ---- single-pass moments (one mul + two reductions per stream) ----------
    # NOTE: E[x^2]-E[x]^2 in f32 can lose precision for activations with a very
    # large mean relative to their spread; validated against the two-pass
    # reference below. max(.,0) guards cancellation in (near-)constant rows and
    # in garbage-padded partial last blocks.
    c_sum = jnp.sum(c, axis=-1, keepdims=True)
    c_sumsq = jnp.sum(c * c, axis=-1, keepdims=True)
    c_mean = c_sum * (1.0 / hw_c)
    c_var = jnp.maximum(c_sumsq - c_sum * c_mean, 0.0) * (1.0 / (hw_c - 1)) + eps

    s_sum = jnp.sum(s, axis=-1, keepdims=True)
    s_sumsq = jnp.sum(s * s, axis=-1, keepdims=True)
    s_mean = s_sum * (1.0 / hw_s)
    s_var = jnp.maximum(s_sumsq - s_sum * s_mean, 0.0) * (1.0 / (hw_s - 1)) + eps

    # ---- fused per-row affine: out = c * scale + bias ------------------------
    # sqrt/rsqrt act on tiny (rb, 1) stats (EUP slot); the full (rb, HW) tile
    # sees exactly one mul + one add.
    scale = jnp.sqrt(s_var) * jax.lax.rsqrt(c_var)
    bias = s_mean - c_mean * scale

    o_ref[...] = (c * scale + bias).astype(o_ref.dtype)


def adain(content, style, *, eps=1e-5):
    """AdaIN forward. content, style: NCHW with identical (N, C)."""
    assert content.shape[:2] == style.shape[:2]
    N, C, Hc, Wc = content.shape
    _, _, Hs, Ws = style.shape

    rows = N * C
    hw_c = Hc * Wc
    hw_s = Hs * Ws
    # Unbiased variance divides by (H*W - 1): H*W must be > 1 (as in torch).
    assert hw_c > 1 and hw_s > 1, "AdaIN needs H*W > 1 for unbiased variance"

    c2 = content.reshape(rows, hw_c)
    s2 = style.reshape(rows, hw_s)

    itemsize = jnp.dtype(content.dtype).itemsize

    # ---- per-generation VMEM budget ------------------------------------------
    try:
        vmem_cap = int(pltpu.get_tpu_info().vmem_capacity_bytes)
    except Exception:
        vmem_cap = 64 * 1024 * 1024  # conservative fallback (v7x per-TC)
    # ~25% headroom for compiler scratch: 128 MiB -> 96 MiB (v5e/v6e),
    # 64 MiB -> 48 MiB (v7x per-TC).
    vmem_limit = (vmem_cap * 3) // 4

    # Per-row footprint: 3 HBM streams (content in, style in, out), each
    # double-buffered by the pipeline, plus f32 compute temporaries (the
    # .astype(f32) copies and one squared temp) which are NOT double-buffered.
    stream_bytes_per_row = (2 * hw_c + hw_s) * itemsize * 2
    temp_bytes_per_row = (hw_c + hw_s) * 4
    if itemsize < 4:
        temp_bytes_per_row += (hw_c + hw_s) * 4  # extra full-tile f32 casts
    bytes_per_row = stream_bytes_per_row + temp_bytes_per_row
    rb_vmem = int(0.8 * vmem_limit) // max(bytes_per_row, 1)

    # ---- block size by bytes, not by a fixed row cap --------------------------
    # Aim for <= ~8 MiB per content stream per block (per-step overhead is
    # already negligible well below that), never exceed the VMEM budget.
    max_stream_bytes = 8 << 20
    rb_cap = max(8, max_stream_bytes // max(hw_c * itemsize, 1))
    rb = max(8, min(rb_vmem, rb_cap))
    rb = (rb // 8) * 8                      # sublane-aligned
    rb = min(rb, _round_up(rows, 8))        # don't exceed the (padded) row count

    # ---- grid depth: >= 4 steps (>= 2 per TC on v7x) when blocks stay big -----
    min_stream_bytes = 1 << 20
    rb_floor = max(8, _round_up(pl.cdiv(min_stream_bytes,
                                        max(hw_c * itemsize, 1)), 8))
    if rows >= 4 * 8:
        rb_4steps = _round_up(pl.cdiv(rows, 4), 8)
        rb = min(rb, max(rb_4steps, rb_floor))
    rb = max(8, min(rb, _round_up(rows, 8)))
    rb = (rb // 8) * 8

    grid = (pl.cdiv(rows, rb),)

    cost = pl.CostEstimate(
        flops=rows * (5 * hw_c + 3 * hw_s),
        transcendentals=2 * rows,
        bytes_accessed=(2 * rows * hw_c + rows * hw_s) * itemsize,
    )

    out2 = pl.pallas_call(
        functools.partial(_adain_kernel, eps=eps),
        out_shape=jax.ShapeDtypeStruct((rows, hw_c), content.dtype),
        grid_spec=pltpu.PrefetchScalarGridSpec(
            num_scalar_prefetch=0,
            grid=grid,
            in_specs=[
                pl.BlockSpec((rb, hw_c), lambda i: (i, 0)),
                pl.BlockSpec((rb, hw_s), lambda i: (i, 0)),
            ],
            out_specs=pl.BlockSpec((rb, hw_c), lambda i: (i, 0)),
        ),
        compiler_params=pltpu.CompilerParams(
            dimension_semantics=("parallel",),
            vmem_limit_bytes=vmem_limit,
        ),
        cost_estimate=cost,
    )(c2, s2)

    return out2.reshape(N, C, Hc, Wc)


def _adain_ref(content, style, eps=1e-5):
    """Pure-JAX reference mirroring the PyTorch module (unbiased var)."""
    N, C = content.shape[:2]

    def stats(x):
        xf = x.reshape(N, C, -1).astype(jnp.float32)
        mean = jnp.mean(xf, axis=2)
        var = jnp.var(xf, axis=2, ddof=1) + eps
        std = jnp.sqrt(var)
        return mean[:, :, None, None], std[:, :, None, None]

    s_mean, s_std = stats(style)
    c_mean, c_std = stats(content)
    normalized = (content.astype(jnp.float32) - c_mean) / c_std
    return (normalized * s_std + s_mean).astype(content.dtype)


if __name__ == "__main__":
    key = jax.random.PRNGKey(0)
    k1, k2 = jax.random.split(key)

    # Small shapes consistent with an NCHW feature map pair.
    content = jax.random.normal(k1, (2, 4, 16, 16), dtype=jnp.float32)
    style = jax.random.normal(k2, (2, 4, 16, 16), dtype=jnp.float32) * 2.0 + 0.5

    out = adain(content, style)
    out = jax.block_until_ready(out)

    ref = _adain_ref(content, style)
    assert out.shape == content.shape and out.dtype == content.dtype
    assert jnp.allclose(out, ref, atol=1e-4, rtol=1e-4), "mismatch vs reference"

    print("KERNEL_OK")
</pallas_src>

<mosaic_0001>
module attributes {stable_mosaic.version = 11 : i64} {
  func.func @_adain_kernel(%arg0: i32, %arg1: memref<8x256xf32, #tpu.memory_space<vmem>>, %arg2: memref<8x256xf32, #tpu.memory_space<vmem>>, %arg3: memref<8x256xf32, #tpu.memory_space<vmem>>) attributes {dimension_semantics = [#tpu.dimension_semantics<parallel>], iteration_bounds = array<i64: 1>, scalar_prefetch = 0 : i64, scratch_operands = 0 : i64, tpu.core_type = #tpu.core_type<tc>, window_params = [{transform_indices = @transform_0, window_bounds = array<i64: 8, 256>}, {transform_indices = @transform_1, window_bounds = array<i64: 8, 256>}, {transform_indices = @transform_2, window_bounds = array<i64: 8, 256>}]} {
    %c0 = arith.constant 0 : index
    %c0_0 = arith.constant 0 : index
    %0 = vector.load %arg1[%c0, %c0_0] : memref<8x256xf32, #tpu.memory_space<vmem>>, vector<8x256xf32>
    %c0_1 = arith.constant 0 : index
    %c0_2 = arith.constant 0 : index
    %1 = vector.load %arg2[%c0_1, %c0_2] : memref<8x256xf32, #tpu.memory_space<vmem>>, vector<8x256xf32>
    %cst = arith.constant dense<0.000000e+00> : vector<8xf32>
    %2 = vector.multi_reduction <add>, %0, %cst [1] : vector<8x256xf32> to vector<8xf32>
    %3 = vector.shape_cast %2 : vector<8xf32> to vector<8x1xf32>
    %4 = arith.mulf %0, %0 : vector<8x256xf32>
    %cst_3 = arith.constant dense<0.000000e+00> : vector<8xf32>
    %5 = vector.multi_reduction <add>, %4, %cst_3 [1] : vector<8x256xf32> to vector<8xf32>
    %6 = vector.shape_cast %5 : vector<8xf32> to vector<8x1xf32>
    %cst_4 = arith.constant 3.906250e-03 : f32
    %7 = vector.broadcast %cst_4 : f32 to vector<8x1xf32>
    %8 = arith.mulf %3, %7 : vector<8x1xf32>
    %9 = arith.mulf %3, %8 : vector<8x1xf32>
    %10 = arith.subf %6, %9 : vector<8x1xf32>
    %cst_5 = arith.constant 0.000000e+00 : f32
    %11 = vector.broadcast %cst_5 : f32 to vector<8x1xf32>
    %12 = arith.maximumf %10, %11 : vector<8x1xf32>
    %cst_6 = arith.constant 0.00392156886 : f32
    %13 = vector.broadcast %cst_6 : f32 to vector<8x1xf32>
    %14 = arith.mulf %12, %13 : vector<8x1xf32>
    %cst_7 = arith.constant 9.99999974E-6 : f32
    %15 = vector.broadcast %cst_7 : f32 to vector<8x1xf32>
    %16 = arith.addf %14, %15 : vector<8x1xf32>
    %cst_8 = arith.constant dense<0.000000e+00> : vector<8xf32>
    %17 = vector.multi_reduction <add>, %1, %cst_8 [1] : vector<8x256xf32> to vector<8xf32>
    %18 = vector.shape_cast %17 : vector<8xf32> to vector<8x1xf32>
    %19 = arith.mulf %1, %1 : vector<8x256xf32>
    %cst_9 = arith.constant dense<0.000000e+00> : vector<8xf32>
    %20 = vector.multi_reduction <add>, %19, %cst_9 [1] : vector<8x256xf32> to vector<8xf32>
    %21 = vector.shape_cast %20 : vector<8xf32> to vector<8x1xf32>
    %cst_10 = arith.constant 3.906250e-03 : f32
    %22 = vector.broadcast %cst_10 : f32 to vector<8x1xf32>
    %23 = arith.mulf %18, %22 : vector<8x1xf32>
    %24 = arith.mulf %18, %23 : vector<8x1xf32>
    %25 = arith.subf %21, %24 : vector<8x1xf32>
    %cst_11 = arith.constant 0.000000e+00 : f32
    %26 = vector.broadcast %cst_11 : f32 to vector<8x1xf32>
    %27 = arith.maximumf %25, %26 : vector<8x1xf32>
    %cst_12 = arith.constant 0.00392156886 : f32
    %28 = vector.broadcast %cst_12 : f32 to vector<8x1xf32>
    %29 = arith.mulf %27, %28 : vector<8x1xf32>
    %cst_13 = arith.constant 9.99999974E-6 : f32
    %30 = vector.broadcast %cst_13 : f32 to vector<8x1xf32>
    %31 = arith.addf %29, %30 : vector<8x1xf32>
    %32 = math.sqrt %31 : vector<8x1xf32>
    %33 = math.rsqrt %16 : vector<8x1xf32>
    %34 = arith.mulf %32, %33 : vector<8x1xf32>
    %35 = arith.mulf %8, %34 : vector<8x1xf32>
    %36 = arith.subf %23, %35 : vector<8x1xf32>
    %37 = vector.broadcast %34 : vector<8x1xf32> to vector<8x256xf32>
    %38 = arith.mulf %0, %37 : vector<8x256xf32>
    %39 = vector.broadcast %36 : vector<8x1xf32> to vector<8x256xf32>
    %40 = arith.addf %38, %39 : vector<8x256xf32>
    %c0_14 = arith.constant 0 : index
    %c0_15 = arith.constant 0 : index
    %41 = vector.load %arg3[%c0_14, %c0_15] : memref<8x256xf32, #tpu.memory_space<vmem>>, vector<8x256xf32>
    tpu.vector_store %arg3[%c0_14, %c0_15], %40 {strides = array<i32>} : memref<8x256xf32, #tpu.memory_space<vmem>>, vector<8x256xf32>,
    return
  }
  func.func @transform_0(%arg0: i32) -> (i32, i32) {
    %c0_i32 = arith.constant 0 : i32
    %c0_i32_0 = arith.constant 0 : i32
    return %arg0, %c0_i32 : i32, i32
  }
  func.func @transform_1(%arg0: i32) -> (i32, i32) {
    %c0_i32 = arith.constant 0 : i32
    %c0_i32_0 = arith.constant 0 : i32
    return %arg0, %c0_i32 : i32, i32
  }
  func.func @transform_2(%arg0: i32) -> (i32, i32) {
    %c0_i32 = arith.constant 0 : i32
    %c0_i32_0 = arith.constant 0 : i32
    return %arg0, %c0_i32 : i32, i32
  }
}

</mosaic_0001>

<llo_original>
// kernel: tpu_custom_call.1
$region0: #{tpu_custom_call.1}
  #allocation0 [shape = 'u32[]', space=smem, size = 0x4, offset = 0x4, fixed_abs, tag = 'smem constant byte address 0x4 - core index']
  #allocation1 [shape = 'u32[144,128]{1,0:T(1,128)}', space=vmem, size = 0x12000, scoped, tag = 'internal scratch']
  %s0 = inlined_call_operand.hbm [shape: f32[8,256], index: 0, kind: input, shape index: {}]
  %s1 = inlined_call_operand.hbm [shape: f32[8,256], index: 1, kind: input, shape index: {}]
  %s2 = inlined_call_operand.hbm [shape: f32[8,256], index: 2, kind: output, shape index: {}]
  %s3 = sld [smem:[#allocation0]]
  $region26: #{tpu_custom_call.1} parent=0
    _
  %s5 = ssub.s32 1, %s3
  %s6 = scalar_select 0, %s5, %s3
  $region1: #{tpu_custom_call.1} parent=0
    #allocation2 [shape = 'u8[8192]{0}', space=vmem, size = 0x2000, scoped, tag = 'input window, operand 0, single buffered']
    #allocation3 [shape = 's32[1]{0}', space=sflag, size = 0x4, scoped, tag = 'scoped memory for tpu_custom_call.1']
    #allocation4 [shape = 's32[1]{0}', space=sflag, size = 0x4, scoped, tag = 'scoped memory for tpu_custom_call.1']
    #allocation5 [shape = 'u8[8192]{0}', space=vmem, size = 0x2000, scoped, tag = 'input window, operand 1, single buffered']
    #allocation6 [shape = 's32[1]{0}', space=sflag, size = 0x4, scoped, tag = 'scoped memory for tpu_custom_call.1']
    #allocation7 [shape = 'u8[8192]{0}', space=vmem, size = 0x2000, scoped, tag = 'output window, operand 0, single buffered']
    %7 = vsyncpa [#allocation3], 0
    %8 = vsyncpa [#allocation6], 0
    %9 = vsyncpa [#allocation4], 0
    // Predicated region
    $region2: #{tpu_custom_call.1} parent=1 // pred_check
      _
    $region3: #{tpu_custom_call.1} parent=1 // pred_check_branch
      %11 = sbr.rel (0) target = $region5
    $region4: #{tpu_custom_call.1} parent=1 // pred_region
      %s13 = ssub.s32 256, 256
      %14 = vsyncadd [#allocation3], %s13
      %s16 = sshll.u32 [#allocation2], 4
      %s17 = int_to_ptr.vmem [resolvable:$true] %s16
      %19 = dma.hbm_to_vmem [thread:$0]  %s0, 256, %s17, [#allocation3]
    $region5: #{tpu_custom_call.1} parent=1 // pred_fallthru
      _
    // Predicated region
    $region6: #{tpu_custom_call.1} parent=1 // pred_check
      _
    $region7: #{tpu_custom_call.1} parent=1 // pred_check_branch
      %21 = sbr.rel (0) target = $region9
    $region8: #{tpu_custom_call.1} parent=1 // pred_region
      %s23 = ssub.s32 256, 256
      %24 = vsyncadd [#allocation6], %s23
      %s26 = sshll.u32 [#allocation5], 4
      %s27 = int_to_ptr.vmem [resolvable:$true] %s26
      %29 = dma.hbm_to_vmem [thread:$0]  %s1, 256, %s27, [#allocation6]
    $region9: #{tpu_custom_call.1} parent=1 // pred_fallthru
      _
    // Predicated region
    $region10: #{tpu_custom_call.1} parent=1 // pred_check
      _
    $region11: #{tpu_custom_call.1} parent=1 // pred_check_branch
      %31 = sbr.rel (0) target = $region13
    $region12: #{tpu_custom_call.1} parent=1 // pred_region
      %32 = dma.done [#allocation3], 256
    $region13: #{tpu_custom_call.1} parent=1 // pred_fallthru
      _
    // Predicated region
    $region14: #{tpu_custom_call.1} parent=1 // pred_check
      _
    $region15: #{tpu_custom_call.1} parent=1 // pred_check_branch
      %34 = sbr.rel (0) target = $region17
    $region16: #{tpu_custom_call.1} parent=1 // pred_region
      %35 = dma.done [#allocation6], 256
    $region17: #{tpu_custom_call.1} parent=1 // pred_fallthru
      _
    %v36 = vld [vmem:[#allocation2] sm:$0xff]
    %v37 = vld [vmem:[#allocation2 + $0x8] sm:$0xff]
    %v38 = vld [vmem:[#allocation5] sm:$0xff]
    %v39 = vld [vmem:[#allocation5 + $0x8] sm:$0xff]
    %v40 = vadd.f32 %v36, %v37
    %41 = vadd.xlane.f32.xlu0 %v40
    %v42 = vpop.xlane.xlu0 %41
    %v43 = vmul.f32 %v36, %v36
    %v44 = vmul.f32 %v37, %v37
    %v45 = vadd.f32 %v43, %v44
    %46 = vadd.xlane.f32.xlu0 %v45
    %v47 = vpop.xlane.xlu0 %46
    %v48 = vmul.f32 %v42, 0.00390625
    %v49 = vmul.f32 %v42, %v48
    %v50 = vsub.f32 %v47, %v49
    %v51 = vmax.f32 %v50, 0.0
    %v52 = vmul.f32 %v51, 0.003921569
    %v53 = vadd.f32 %v52, 1e-05
    %v54 = vadd.f32 %v38, %v39
    %55 = vadd.xlane.f32.xlu0 %v54
    %v56 = vpop.xlane.xlu0 %55
    %v57 = vmul.f32 %v38, %v38
    %v58 = vmul.f32 %v39, %v39
    %v59 = vadd.f32 %v57, %v58
    %60 = vadd.xlane.f32.xlu0 %v59
    %v61 = vpop.xlane.xlu0 %60
    %v62 = vmul.f32 %v56, 0.00390625
    %v63 = vmul.f32 %v56, %v62
    %v64 = vsub.f32 %v61, %v63
    %v65 = vmax.f32 %v64, 0.0
    %v66 = vmul.f32 %v65, 0.003921569
    %v67 = vadd.f32 %v66, 1e-05
    %v68 = vrsqrt.pop %v67
    %v69 = vmul.f32 %v67, %v68
    %vm70 = vcmp.eq.f32.partialorder %v67, inf
    %v71 = vsel %vm70, %v67, %v69
    %vm72 = vcmp.eq.f32.partialorder %v67, 0.0
    %v73 = vand.u32 %v67, 2147483648
    %v74 = vsel %vm72, %v73, %v71
    %v75 = vrsqrt.pop %v53
    %v76 = vmul.f32 %v74, %v75
    %v77 = vmul.f32 %v48, %v76
    %v78 = vsub.f32 %v62, %v77
    %v79 = vmul.f32 %v36, %v76
    %v80 = vmul.f32 %v37, %v76
    %v81 = vadd.f32 %v79, %v78
    %v82 = vadd.f32 %v80, %v78
    %83 = vst [vmem:[#allocation7] sm:$0xff] %v81
    %84 = vst [vmem:[#allocation7 + $0x8] sm:$0xff] %v82
    // Predicated region
    $region18: #{tpu_custom_call.1} parent=1 // pred_check
      _
    $region19: #{tpu_custom_call.1} parent=1 // pred_check_branch
      %86 = sbr.rel (0) target = $region21
    $region20: #{tpu_custom_call.1} parent=1 // pred_region
      %s88 = ssub.s32 256, 256
      %89 = vsyncadd [#allocation4], %s88
      %s91 = sshll.u32 [#allocation7], 4
      %s92 = int_to_ptr.vmem [resolvable:$true] %s91
      %94 = dma.vmem_to_hbm [thread:$0]  %s92, 256, %s2, [#allocation4]
    $region21: #{tpu_custom_call.1} parent=1 // pred_fallthru
      _
    // Predicated region
    $region22: #{tpu_custom_call.1} parent=1 // pred_check
      _
    $region23: #{tpu_custom_call.1} parent=1 // pred_check_branch
      %96 = sbr.rel (0) target = $region25
    $region24: #{tpu_custom_call.1} parent=1 // pred_region
      %97 = dma.done [#allocation4], 256
    $region25: #{tpu_custom_call.1} parent=1 // pred_fallthru
      _
    %98 = vsyncpa [#allocation3], 1
    %99 = vsyncpa [#allocation6], 1
    %100 = vsyncpa [#allocation4], 1

</llo_original>
